<compile_context>
chip_gen: v5e
topology: v5e:2x2
jax: 0.10.0
libtpu: 0.0.40
codegen_flags: <defaults>
</compile_context>

<pallas_src>
import jax
import jax.numpy as jnp
from jax.experimental import pallas as pl
from jax.experimental.pallas import tpu as pltpu

HIDDEN = 64   # nn.Linear(in_dim, 64), nn.Linear(64, 64)


def _round_up(x, m):
    return ((x + m - 1) // m) * m


def _mlp_kernel(x_ref, w1_ref, b1_ref, w2_ref, b2_ref, w3_ref, b3_ref, o_ref):
    # One batch tile per grid step; weights/biases are VMEM-resident across steps.
    x = x_ref[...]
    h1 = jnp.dot(x, w1_ref[...], preferred_element_type=jnp.float32) + b1_ref[...]
    h1 = jnp.maximum(h1, 0.0)
    h2 = jnp.dot(h1, w2_ref[...], preferred_element_type=jnp.float32) + b2_ref[...]
    h2 = jnp.maximum(h2, 0.0)
    # Write only the real out_dim columns (block last dim == full array dim).
    o_ref[...] = jnp.dot(h2, w3_ref[...], preferred_element_type=jnp.float32) + b3_ref[...]


def feed_forward_critic(x, params, *, block_b=4096):
    """x: [B, in_dim] float32; params: dict of w1,b1,w2,b2,w3,b3 (w as [in,out])."""
    w1, b1, w2, b2, w3, b3 = (params[k] for k in ("w1", "b1", "w2", "b2", "w3", "b3"))
    x = x.astype(jnp.float32)
    B, in_dim = x.shape
    hidden = w1.shape[1]
    out_dim = w3.shape[1]

    # --- batch tiling: TB multiple of 8, no wrapper-side padding of x -------
    TB = min(block_b, _round_up(B, 8))
    # v7x: prefer >= 2 grid steps (one per TensorCore) when B is large enough
    # that each half-tile still amortizes per-step overhead.
    if pl.cdiv(B, TB) < 2 and B >= 512:
        TB = _round_up(pl.cdiv(B, 2), 8)
    grid = (pl.cdiv(B, TB),)  # partial last block is fine: rows are independent

    resident = lambda i: (0, 0)  # weights/biases: same block every step -> stay in VMEM

    out = pl.pallas_call(
        _mlp_kernel,
        out_shape=jax.ShapeDtypeStruct((B, out_dim), jnp.float32),
        grid_spec=pltpu.PrefetchScalarGridSpec(
            num_scalar_prefetch=0,
            grid=grid,
            in_specs=[
                pl.BlockSpec((TB, in_dim), lambda i: (i, 0)),   # x tile (pipelined)
                pl.BlockSpec((in_dim, hidden), resident),        # W1
                pl.BlockSpec((1, hidden), resident),             # b1
                pl.BlockSpec((hidden, hidden), resident),        # W2
                pl.BlockSpec((1, hidden), resident),             # b2
                pl.BlockSpec((hidden, out_dim), resident),       # W3
                pl.BlockSpec((1, out_dim), resident),            # b3
            ],
            out_specs=pl.BlockSpec((TB, out_dim), lambda i: (i, 0)),
        ),
        compiler_params=pltpu.CompilerParams(
            dimension_semantics=("parallel",),  # shards grid across v7x's 2 TCs
        ),
    )(x, w1, b1, w2, b2, w3, b3)

    return out


def init_params(key, in_dim, out_dim):
    """Deterministic init mimicking nn.Linear's uniform(-1/sqrt(fan_in), 1/sqrt(fan_in))."""
    ks = jax.random.split(key, 6)

    def linear(kw, kb, fan_in, fan_out):
        bound = 1.0 / jnp.sqrt(jnp.float32(fan_in))
        # stored as [in, out] == W^T relative to PyTorch's [out, in]
        w = jax.random.uniform(kw, (fan_in, fan_out), jnp.float32, -bound, bound)
        b = jax.random.uniform(kb, (1, fan_out), jnp.float32, -bound, bound)
        return w, b

    w1, b1 = linear(ks[0], ks[1], in_dim, HIDDEN)
    w2, b2 = linear(ks[2], ks[3], HIDDEN, HIDDEN)
    w3, b3 = linear(ks[4], ks[5], HIDDEN, out_dim)
    return {"w1": w1, "b1": b1, "w2": w2, "b2": b2, "w3": w3, "b3": b3}


def _reference(x, p):
    h1 = jnp.maximum(x @ p["w1"] + p["b1"], 0.0)
    h2 = jnp.maximum(h1 @ p["w2"] + p["b2"], 0.0)
    return h2 @ p["w3"] + p["b3"]


if __name__ == "__main__":
    key = jax.random.PRNGKey(0)
    k_x, k_p, k_x2 = jax.random.split(key, 3)

    # Small shape consistent with the module (critic over a 16-dim observation).
    batch, in_dim, out_dim = 8, 16, 8
    x = jax.random.normal(k_x, (batch, in_dim), dtype=jnp.float32)
    params = init_params(k_p, in_dim, out_dim)

    out = feed_forward_critic(x, params)
    out = jax.block_until_ready(out)
    ref = _reference(x, params)
    assert out.shape == (batch, out_dim)
    assert jnp.allclose(out, ref, atol=1e-5, rtol=1e-5)

    # Exercise the multi-step grid + partial last block (B not a multiple of TB).
    x2 = jax.random.normal(k_x2, (1000, in_dim), dtype=jnp.float32)
    out2 = jax.block_until_ready(feed_forward_critic(x2, params))
    ref2 = _reference(x2, params)
    assert out2.shape == (1000, out_dim)
    assert jnp.allclose(out2, ref2, atol=1e-5, rtol=1e-5)

    print("KERNEL_OK")
</pallas_src>

<mosaic_0001>
module attributes {stable_mosaic.version = 11 : i64} {
  func.func @_mlp_kernel(%arg0: i32, %arg1: memref<8x16xf32, #tpu.memory_space<vmem>>, %arg2: memref<16x64xf32, #tpu.memory_space<vmem>>, %arg3: memref<1x64xf32, #tpu.memory_space<vmem>>, %arg4: memref<64x64xf32, #tpu.memory_space<vmem>>, %arg5: memref<1x64xf32, #tpu.memory_space<vmem>>, %arg6: memref<64x8xf32, #tpu.memory_space<vmem>>, %arg7: memref<1x8xf32, #tpu.memory_space<vmem>>, %arg8: memref<8x8xf32, #tpu.memory_space<vmem>>) attributes {dimension_semantics = [#tpu.dimension_semantics<parallel>], iteration_bounds = array<i64: 1>, scalar_prefetch = 0 : i64, scratch_operands = 0 : i64, tpu.core_type = #tpu.core_type<tc>, window_params = [{transform_indices = @transform_0, window_bounds = array<i64: 8, 16>}, {pipeline_mode = #tpu.pipeline_mode<synchronous>, transform_indices = @transform_1, window_bounds = array<i64: 16, 64>}, {pipeline_mode = #tpu.pipeline_mode<synchronous>, transform_indices = @transform_2, window_bounds = array<i64: 1, 64>}, {pipeline_mode = #tpu.pipeline_mode<synchronous>, transform_indices = @transform_3, window_bounds = array<i64: 64, 64>}, {pipeline_mode = #tpu.pipeline_mode<synchronous>, transform_indices = @transform_4, window_bounds = array<i64: 1, 64>}, {pipeline_mode = #tpu.pipeline_mode<synchronous>, transform_indices = @transform_5, window_bounds = array<i64: 64, 8>}, {pipeline_mode = #tpu.pipeline_mode<synchronous>, transform_indices = @transform_6, window_bounds = array<i64: 1, 8>}, {transform_indices = @transform_7, window_bounds = array<i64: 8, 8>}]} {
    %c0 = arith.constant 0 : index
    %c0_0 = arith.constant 0 : index
    %0 = vector.load %arg1[%c0, %c0_0] : memref<8x16xf32, #tpu.memory_space<vmem>>, vector<8x16xf32>
    %c0_1 = arith.constant 0 : index
    %c0_2 = arith.constant 0 : index
    %1 = vector.load %arg2[%c0_1, %c0_2] : memref<16x64xf32, #tpu.memory_space<vmem>>, vector<16x64xf32>
    %cst = arith.constant dense<0.000000e+00> : vector<8x64xf32>
    %2 = tpu.matmul %0, %1, %cst {dimension_numbers = #tpu.dot_dimension_numbers<[1], [0], [0], [1], [0, 0, 1, 1], [], []>} : vector<8x16xf32>, vector<16x64xf32>, vector<8x64xf32> -> vector<8x64xf32>
    %c0_3 = arith.constant 0 : index
    %c0_4 = arith.constant 0 : index
    %3 = vector.load %arg3[%c0_3, %c0_4] : memref<1x64xf32, #tpu.memory_space<vmem>>, vector<1x64xf32>
    %4 = vector.broadcast %3 : vector<1x64xf32> to vector<8x64xf32>
    %5 = arith.addf %2, %4 : vector<8x64xf32>
    %cst_5 = arith.constant 0.000000e+00 : f32
    %6 = vector.broadcast %cst_5 : f32 to vector<8x64xf32>
    %7 = arith.maximumf %5, %6 : vector<8x64xf32>
    %c0_6 = arith.constant 0 : index
    %c0_7 = arith.constant 0 : index
    %8 = vector.load %arg4[%c0_6, %c0_7] : memref<64x64xf32, #tpu.memory_space<vmem>>, vector<64x64xf32>
    %cst_8 = arith.constant dense<0.000000e+00> : vector<8x64xf32>
    %9 = tpu.matmul %7, %8, %cst_8 {dimension_numbers = #tpu.dot_dimension_numbers<[1], [0], [0], [1], [0, 0, 1, 1], [], []>} : vector<8x64xf32>, vector<64x64xf32>, vector<8x64xf32> -> vector<8x64xf32>
    %c0_9 = arith.constant 0 : index
    %c0_10 = arith.constant 0 : index
    %10 = vector.load %arg5[%c0_9, %c0_10] : memref<1x64xf32, #tpu.memory_space<vmem>>, vector<1x64xf32>
    %11 = vector.broadcast %10 : vector<1x64xf32> to vector<8x64xf32>
    %12 = arith.addf %9, %11 : vector<8x64xf32>
    %cst_11 = arith.constant 0.000000e+00 : f32
    %13 = vector.broadcast %cst_11 : f32 to vector<8x64xf32>
    %14 = arith.maximumf %12, %13 : vector<8x64xf32>
    %c0_12 = arith.constant 0 : index
    %c0_13 = arith.constant 0 : index
    %15 = vector.load %arg6[%c0_12, %c0_13] : memref<64x8xf32, #tpu.memory_space<vmem>>, vector<64x8xf32>
    %cst_14 = arith.constant dense<0.000000e+00> : vector<8x8xf32>
    %16 = tpu.matmul %14, %15, %cst_14 {dimension_numbers = #tpu.dot_dimension_numbers<[1], [0], [0], [1], [0, 0, 1, 1], [], []>} : vector<8x64xf32>, vector<64x8xf32>, vector<8x8xf32> -> vector<8x8xf32>
    %c0_15 = arith.constant 0 : index
    %c0_16 = arith.constant 0 : index
    %17 = vector.load %arg7[%c0_15, %c0_16] : memref<1x8xf32, #tpu.memory_space<vmem>>, vector<1x8xf32>
    %18 = vector.broadcast %17 : vector<1x8xf32> to vector<8x8xf32>
    %19 = arith.addf %16, %18 : vector<8x8xf32>
    %c0_17 = arith.constant 0 : index
    %c0_18 = arith.constant 0 : index
    %20 = vector.load %arg8[%c0_17, %c0_18] : memref<8x8xf32, #tpu.memory_space<vmem>>, vector<8x8xf32>
    tpu.vector_store %arg8[%c0_17, %c0_18], %19 {strides = array<i32>} : memref<8x8xf32, #tpu.memory_space<vmem>>, vector<8x8xf32>,
    return
  }
  func.func @transform_0(%arg0: i32) -> (i32, i32) {
    %c0_i32 = arith.constant 0 : i32
    %c0_i32_0 = arith.constant 0 : i32
    return %arg0, %c0_i32 : i32, i32
  }
  func.func @transform_1(%arg0: i32) -> (i32, i32) {
    %c0_i32 = arith.constant 0 : i32
    %c0_i32_0 = arith.constant 0 : i32
    %c0_i32_1 = arith.constant 0 : i32
    return %c0_i32, %c0_i32_0 : i32, i32
  }
  func.func @transform_2(%arg0: i32) -> (i32, i32) {
    %c0_i32 = arith.constant 0 : i32
    %c0_i32_0 = arith.constant 0 : i32
    %c0_i32_1 = arith.constant 0 : i32
    return %c0_i32, %c0_i32_0 : i32, i32
  }
  func.func @transform_3(%arg0: i32) -> (i32, i32) {
    %c0_i32 = arith.constant 0 : i32
    %c0_i32_0 = arith.constant 0 : i32
    %c0_i32_1 = arith.constant 0 : i32
    return %c0_i32, %c0_i32_0 : i32, i32
  }
  func.func @transform_4(%arg0: i32) -> (i32, i32) {
    %c0_i32 = arith.constant 0 : i32
    %c0_i32_0 = arith.constant 0 : i32
    %c0_i32_1 = arith.constant 0 : i32
    return %c0_i32, %c0_i32_0 : i32, i32
  }
  func.func @transform_5(%arg0: i32) -> (i32, i32) {
    %c0_i32 = arith.constant 0 : i32
    %c0_i32_0 = arith.constant 0 : i32
    %c0_i32_1 = arith.constant 0 : i32
    return %c0_i32, %c0_i32_0 : i32, i32
  }
  func.func @transform_6(%arg0: i32) -> (i32, i32) {
    %c0_i32 = arith.constant 0 : i32
    %c0_i32_0 = arith.constant 0 : i32
    %c0_i32_1 = arith.constant 0 : i32
    return %c0_i32, %c0_i32_0 : i32, i32
  }
  func.func @transform_7(%arg0: i32) -> (i32, i32) {
    %c0_i32 = arith.constant 0 : i32
    %c0_i32_0 = arith.constant 0 : i32
    return %arg0, %c0_i32 : i32, i32
  }
}

</mosaic_0001>

<llo_original>
// kernel: tpu_custom_call.1
$region0: #{tpu_custom_call.1}
  #allocation0 [shape = 'u32[]', space=smem, size = 0x4, offset = 0x4, fixed_abs, tag = 'smem constant byte address 0x4 - core index']
  #allocation1 [shape = 'u32[72,128]{1,0:T(1,128)}', space=vmem, size = 0x9000, scoped, tag = 'internal scratch']
  %s0 = inlined_call_operand.vmem [shape: f32[8,16], index: 0, kind: input, shape index: {}]
  %s1 = inlined_call_operand.hbm [shape: f32[16,64], index: 1, kind: input, shape index: {}]
  %s2 = inlined_call_operand.vmem [shape: f32[1,64], index: 2, kind: input, shape index: {}]
  %s3 = inlined_call_operand.vmem [shape: f32[64,64], index: 3, kind: input, shape index: {}]
  %s4 = inlined_call_operand.vmem [shape: f32[1,64], index: 4, kind: input, shape index: {}]
  %s5 = inlined_call_operand.vmem [shape: f32[64,8], index: 5, kind: input, shape index: {}]
  %s6 = inlined_call_operand.vmem [shape: f32[1,8], index: 6, kind: input, shape index: {}]
  %s7 = inlined_call_operand.hbm [shape: f32[8,8], index: 7, kind: output, shape index: {}]
  %s8 = sld [smem:[#allocation0]]
  $region42: #{tpu_custom_call.1} parent=0
    _
  %s10 = ssub.s32 1, %s8
  %s11 = scalar_select 0, %s10, %s8
  $region1: #{tpu_custom_call.1} parent=0
    #allocation2 [shape = 'u8[8192]{0}', space=vmem, size = 0x2000, scoped, tag = 'input window, operand 1, single buffered']
    #allocation3 [shape = 's32[1]{0}', space=sflag, size = 0x4, scoped, tag = 'scoped memory for tpu_custom_call.1']
    #allocation4 [shape = 's32[1]{0}', space=sflag, size = 0x4, scoped, tag = 'scoped memory for tpu_custom_call.1']
    #allocation5 [shape = 'u8[4096]{0}', space=vmem, size = 0x1000, scoped, tag = 'output window, operand 0, single buffered']
    %12 = vsyncpa [#allocation3], 0
    %13 = vsyncpa [#allocation4], 0
    // Predicated region
    $region2: #{tpu_custom_call.1} parent=1 // pred_check
      _
    $region3: #{tpu_custom_call.1} parent=1 // pred_check_branch
      %15 = sbr.rel (0) target = $region5
    $region4: #{tpu_custom_call.1} parent=1 // pred_region
      _
    $region5: #{tpu_custom_call.1} parent=1 // pred_fallthru
      _
    // Predicated region
    $region6: #{tpu_custom_call.1} parent=1 // pred_check
      _
    $region7: #{tpu_custom_call.1} parent=1 // pred_check_branch
      %17 = sbr.rel (0) target = $region9
    $region8: #{tpu_custom_call.1} parent=1 // pred_region
      %19 = vsyncadd [#allocation3], 0
      %s20 = sshll.u32 %s1, 4
      %s21 = int_to_ptr.hbm [resolvable:$true] %s20
      %s22 = sshll.u32 [#allocation2], 4
      %s23 = int_to_ptr.vmem [resolvable:$true] %s22
      %28 = dma.hbm_to_vmem [thread:$0]  %s21, 256, %s23, [#allocation3], 128, 128, 8
    $region9: #{tpu_custom_call.1} parent=1 // pred_fallthru
      _
    // Predicated region
    $region10: #{tpu_custom_call.1} parent=1 // pred_check
      _
    $region11: #{tpu_custom_call.1} parent=1 // pred_check_branch
      %30 = sbr.rel (0) target = $region13
    $region12: #{tpu_custom_call.1} parent=1 // pred_region
      _
    $region13: #{tpu_custom_call.1} parent=1 // pred_fallthru
      _
    // Predicated region
    $region14: #{tpu_custom_call.1} parent=1 // pred_check
      _
    $region15: #{tpu_custom_call.1} parent=1 // pred_check_branch
      %32 = sbr.rel (0) target = $region17
    $region16: #{tpu_custom_call.1} parent=1 // pred_region
      _
    $region17: #{tpu_custom_call.1} parent=1 // pred_fallthru
      _
    // Predicated region
    $region18: #{tpu_custom_call.1} parent=1 // pred_check
      _
    $region19: #{tpu_custom_call.1} parent=1 // pred_check_branch
      %34 = sbr.rel (0) target = $region21
    $region20: #{tpu_custom_call.1} parent=1 // pred_region
      _
    $region21: #{tpu_custom_call.1} parent=1 // pred_fallthru
      _
    // Predicated region
    $region22: #{tpu_custom_call.1} parent=1 // pred_check
      _
    $region23: #{tpu_custom_call.1} parent=1 // pred_check_branch
      %36 = sbr.rel (0) target = $region25
    $region24: #{tpu_custom_call.1} parent=1 // pred_region
      _
    $region25: #{tpu_custom_call.1} parent=1 // pred_fallthru
      _
    // Predicated region
    $region26: #{tpu_custom_call.1} parent=1 // pred_check
      _
    $region27: #{tpu_custom_call.1} parent=1 // pred_check_branch
      %38 = sbr.rel (0) target = $region29
    $region28: #{tpu_custom_call.1} parent=1 // pred_region
      _
    $region29: #{tpu_custom_call.1} parent=1 // pred_fallthru
      _
    // Predicated region
    $region30: #{tpu_custom_call.1} parent=1 // pred_check
      _
    $region31: #{tpu_custom_call.1} parent=1 // pred_check_branch
      %40 = sbr.rel (0) target = $region33
    $region32: #{tpu_custom_call.1} parent=1 // pred_region
      %42 = dma.done [#allocation3], 256
    $region33: #{tpu_custom_call.1} parent=1 // pred_fallthru
      _
    %v43 = vld [vmem:[%s0] sm:$0xff]
    %v44 = vld [vmem:[#allocation2] sm:$0xff]
    %v45 = vld [vmem:[#allocation2 + $0x8] sm:$0xff]
    %v46 = vld [vmem:[%s2] sm:$0x1]
    %v48 = vperm.slane %v46, 0
    %vm50 = vcmask 130048
    %v52 = vsel %vm50, %v43, 0
    %54 = vmatpush.msra.mxu0 0.0
    %55 = vmatpush.msra.mxu0 0.0
    %56 = vmatpush.msra.mxu0 0.0
    %57 = vmatpush.msra.mxu0 0.0
    %58 = vmatpush.msra.mxu0 0.0
    %59 = vmatpush.msra.mxu0 0.0
    %60 = vmatpush.msra.mxu0 0.0
    %61 = vmatpush.msra.mxu0 0.0
    %62 = vmatpush.msra.mxu0 0.0
    %63 = vmatpush.msra.mxu0 0.0
    %64 = vmatpush.msra.mxu0 0.0
    %65 = vmatpush.msra.mxu0 0.0
    %66 = vmatpush.msra.mxu0 0.0
    %67 = vmatpush.msra.mxu0 0.0
    %68 = vmatpush.msra.mxu0 %v45
    %69 = vmatpush.msra.mxu0 %v44
    %70 = vmatmul.f32.gmra.mxu0 %v52
    %v71 = vpop.f32.mrf.mxu0
    %v72 = vadd.f32 %v48, %v71
    %73 = vdwg.mxu0
    %v74 = vmax.f32 %v72, 0.0
    %v75 = vld [vmem:[%s3] sm:$0xff]
    %v76 = vld [vmem:[%s3 + $0x8] sm:$0xff]
    %v77 = vld [vmem:[%s3 + $0x10] sm:$0xff]
    %v78 = vld [vmem:[%s3 + $0x18] sm:$0xff]
    %v79 = vld [vmem:[%s3 + $0x20] sm:$0xff]
    %v80 = vld [vmem:[%s3 + $0x28] sm:$0xff]
    %v81 = vld [vmem:[%s3 + $0x30] sm:$0xff]
    %v82 = vld [vmem:[%s3 + $0x38] sm:$0xff]
    %v83 = vld [vmem:[%s4] sm:$0x1]
    %v85 = vperm.slane %v83, 0
    %vm87 = vcmask 523264
    %v89 = vsel %vm87, %v74, 0
    %91 = vmatpush.msra.mxu0 0.0
    %92 = vmatpush.msra.mxu0 0.0
    %93 = vmatpush.msra.mxu0 0.0
    %94 = vmatpush.msra.mxu0 0.0
    %95 = vmatpush.msra.mxu0 0.0
    %96 = vmatpush.msra.mxu0 0.0
    %97 = vmatpush.msra.mxu0 0.0
    %98 = vmatpush.msra.mxu0 0.0
    %99 = vmatpush.msra.mxu0 %v82
    %100 = vmatpush.msra.mxu0 %v81
    %101 = vmatpush.msra.mxu0 %v80
    %102 = vmatpush.msra.mxu0 %v79
    %103 = vmatpush.msra.mxu0 %v78
    %104 = vmatpush.msra.mxu0 %v77
    %105 = vmatpush.msra.mxu0 %v76
    %106 = vmatpush.msra.mxu0 %v75
    %107 = vmatmul.f32.gmra.mxu0 %v89
    %v108 = vpop.f32.mrf.mxu0
    %v109 = vadd.f32 %v85, %v108
    %110 = vdwg.mxu0
    %v111 = vmax.f32 %v109, 0.0
    %v112 = vld [vmem:[%s5] sm:$0xff]
    %v113 = vld [vmem:[%s5 + $0x8] sm:$0xff]
    %v114 = vld [vmem:[%s5 + $0x10] sm:$0xff]
    %v115 = vld [vmem:[%s5 + $0x18] sm:$0xff]
    %v116 = vld [vmem:[%s5 + $0x20] sm:$0xff]
    %v117 = vld [vmem:[%s5 + $0x28] sm:$0xff]
    %v118 = vld [vmem:[%s5 + $0x30] sm:$0xff]
    %v119 = vld [vmem:[%s5 + $0x38] sm:$0xff]
    %v120 = vld [vmem:[%s6] sm:$0x1]
    %v122 = vperm.slane %v120, 0
    %v125 = vsel %vm87, %v111, 0
    %127 = vmatpush.msra.mxu0 0.0
    %128 = vmatpush.msra.mxu0 0.0
    %129 = vmatpush.msra.mxu0 0.0
    %130 = vmatpush.msra.mxu0 0.0
    %131 = vmatpush.msra.mxu0 0.0
    %132 = vmatpush.msra.mxu0 0.0
    %133 = vmatpush.msra.mxu0 0.0
    %134 = vmatpush.msra.mxu0 0.0
    %135 = vmatpush.msra.mxu0 %v119
    %136 = vmatpush.msra.mxu0 %v118
    %137 = vmatpush.msra.mxu0 %v117
    %138 = vmatpush.msra.mxu0 %v116
    %139 = vmatpush.msra.mxu0 %v115
    %140 = vmatpush.msra.mxu0 %v114
    %141 = vmatpush.msra.mxu0 %v113
    %142 = vmatpush.msra.mxu0 %v112
    %143 = vmatmul.f32.gmra.mxu0 %v125
    %v144 = vpop.f32.mrf.mxu0
    %v145 = vadd.f32 %v122, %v144
    %146 = vdwg.mxu0
    %vm147 = vcmask 64512
    %148 = vst.msk [vmem:[#allocation5] sm:$0xff] %vm147, %v145
    // Predicated region
    $region34: #{tpu_custom_call.1} parent=1 // pred_check
      _
    $region35: #{tpu_custom_call.1} parent=1 // pred_check_branch
      %150 = sbr.rel (0) target = $region37
    $region36: #{tpu_custom_call.1} parent=1 // pred_region
      %152 = vsyncadd [#allocation4], 0
      %s154 = sshll.u32 [#allocation5], 4
      %s155 = int_to_ptr.vmem [resolvable:$true] %s154
      %s156 = sshll.u32 %s7, 4
      %s157 = int_to_ptr.hbm [resolvable:$true] %s156
      %159 = dma.vmem_to_hbm [thread:$0]  %s155, 128, %s157, [#allocation4]
    $region37: #{tpu_custom_call.1} parent=1 // pred_fallthru
      _
    // Predicated region
    $region38: #{tpu_custom_call.1} parent=1 // pred_check
      _
    $region39: #{tpu_custom_call.1} parent=1 // pred_check_branch
      %161 = sbr.rel (0) target = $region41
    $region40: #{tpu_custom_call.1} parent=1 // pred_region
      %163 = dma.done [#allocation4], 128
    $region41: #{tpu_custom_call.1} parent=1 // pred_fallthru
      _
    %164 = vsyncpa [#allocation3], 1
    %165 = vsyncpa [#allocation4], 1

</llo_original>
